<compile_context>
chip_gen: v6e
topology: v6e:2x2x1
jax: 0.10.0
libtpu: 0.0.40
codegen_flags: <defaults>
</compile_context>

<pallas_src>
import jax
import jax.numpy as jnp
from jax.experimental import pallas as pl
from jax.experimental.pallas import tpu as pltpu


def _choose_spatial_tile(C, HW, itemsize,
                         max_groups=16, budget_bytes=8 * 1024 * 1024):
    """Largest multiple-of-128 spatial tile that keeps the double-buffered
    x stream within ~budget_bytes (per-generation-safe: fits v5e/v6e/v7x)."""
    if HW <= 128:
        return HW
    by_budget = max(1, budget_bytes // (2 * C * itemsize * 128)) * 128
    t = min(max_groups * 128, by_budget, (HW // 128) * 128)
    return max(t, 128)


def _make_kernel(HW, t_hw):
    GW = min(128, t_hw)                 # lane-group width (== accumulator width)
    n_groups = t_hw // GW               # static unroll count (small)
    needs_mask = (HW % t_hw) != 0       # only the last tile can be partial
    inv_hw = 1.0 / float(HW)

    def kernel(x_ref, w1t_ref, w2t_ref, o_ref, sum_acc, max_acc):
        s = pl.program_id(1)

        # --- init running accumulators at the first spatial tile of a batch ---
        @pl.when(s == 0)
        def _init():
            sum_acc[...] = jnp.zeros_like(sum_acc)
            max_acc[...] = jnp.full_like(max_acc, -jnp.inf)

        # --- streaming accumulate: pure VPU adds / maxes, no per-tile XLU ---
        for g in range(n_groups):                     # static, small unroll
            lo = g * GW
            chunk = x_ref[0, :, lo:lo + GW].astype(jnp.float32)   # (C, GW)
            if needs_mask:
                lane = jax.lax.broadcasted_iota(jnp.int32, chunk.shape, 1)
                pos = s * t_hw + lo + lane
                valid = pos < HW
                sum_acc[...] += jnp.where(valid, chunk, 0.0)
                max_acc[...] = jnp.maximum(
                    max_acc[...], jnp.where(valid, chunk, -jnp.inf))
            else:
                sum_acc[...] += chunk
                max_acc[...] = jnp.maximum(max_acc[...], chunk)

        # --- finalize: pooled vectors -> fc1/relu -> fc2 -> sigmoid ---
        @pl.when(s == pl.num_programs(1) - 1)
        def _finalize():
            # single cross-lane reduce per batch; divide by full H*W once.
            avg_c = jnp.sum(sum_acc[...], axis=1, keepdims=True) * inv_hw  # (C,1)
            max_c = jnp.max(max_acc[...], axis=1, keepdims=True)          # (C,1)

            w1t = w1t_ref[...]   # (C, hidden)  == fc1 weight, transposed
            w2t = w2t_ref[...]   # (hidden, C)  == fc2 weight, transposed

            # fc1 + ReLU as broadcast-multiply + sublane reduce (VPU/XLU only);
            # fc2 is linear, so fc2(relu(h_avg)) + fc2(relu(h_max))
            #               == fc2(relu(h_avg) + relu(h_max)).
            h = (jnp.maximum(jnp.sum(w1t * avg_c, axis=0, keepdims=True), 0.0) +
                 jnp.maximum(jnp.sum(w1t * max_c, axis=0, keepdims=True), 0.0))
            # (1, hidden)

            # fc2: one tiny dot per batch, result already lane-dense (1, C).
            y = jnp.dot(h, w2t, preferred_element_type=jnp.float32)       # (1,C)
            o_ref[0] = jax.nn.sigmoid(y).astype(o_ref.dtype)

    return kernel


def channel_attention(x, w1, w2, *, t_hw=None,
                      vmem_limit_bytes=32 * 1024 * 1024):
    """x: (B, C, H, W); w1: (C//r, C) (fc1 1x1 conv); w2: (C, C//r) (fc2 1x1 conv).
    Returns sigmoid channel-attention map of shape (B, C, 1, 1)."""
    B, C, H, W = x.shape
    hidden = w1.shape[0]
    HW = H * W
    x_flat = x.reshape(B, C, HW)            # free reshape, NCHW is contiguous
    itemsize = jnp.dtype(x.dtype).itemsize

    if HW <= 128:
        t_hw = HW
    else:
        if t_hw is None:
            t_hw = _choose_spatial_tile(C, HW, itemsize)
        assert t_hw % 128 == 0 and t_hw >= 128, "t_hw must be a multiple of 128"
        t_hw = min(t_hw, (HW // 128) * 128)
    n_spatial = pl.cdiv(HW, t_hw)
    GW = min(128, t_hw)

    grid_spec = pltpu.PrefetchScalarGridSpec(
        num_scalar_prefetch=0,
        grid=(B, n_spatial),                       # reduction (spatial) axis last
        in_specs=[
            pl.BlockSpec((1, C, t_hw), lambda b, s: (b, 0, s)),   # streamed x
            pl.BlockSpec((C, hidden), lambda b, s: (0, 0)),       # w1^T (resident)
            pl.BlockSpec((hidden, C), lambda b, s: (0, 0)),       # w2^T (resident)
        ],
        out_specs=pl.BlockSpec((1, 1, C), lambda b, s: (b, 0, 0)),  # lane-dense
        scratch_shapes=[
            pltpu.VMEM((C, GW), jnp.float32),     # running sum
            pltpu.VMEM((C, GW), jnp.float32),     # running max
        ],
    )

    bytes_accessed = (x_flat.size * itemsize
                      + (w1.size + w2.size) * jnp.dtype(w1.dtype).itemsize
                      + B * C * itemsize)
    cost = pl.CostEstimate(
        flops=int(2 * B * C * HW + 6 * B * C * hidden),
        transcendentals=int(B * C),
        bytes_accessed=int(bytes_accessed),
    )

    out = pl.pallas_call(
        _make_kernel(HW, t_hw),
        out_shape=jax.ShapeDtypeStruct((B, 1, C), x.dtype),
        grid_spec=grid_spec,
        compiler_params=pltpu.CompilerParams(
            dimension_semantics=("parallel", "arbitrary"),
            vmem_limit_bytes=vmem_limit_bytes,
        ),
        cost_estimate=cost,
    )(x_flat, jnp.transpose(w1), jnp.transpose(w2))

    return out.reshape(B, C, 1, 1)


def channel_attention_ref(x, w1, w2):
    # Pure-JAX reference mirroring the PyTorch forward.
    avg = jnp.mean(x, axis=(2, 3), keepdims=True)  # (B, C, 1, 1)
    mx = jnp.max(x, axis=(2, 3), keepdims=True)    # (B, C, 1, 1)

    def fc_path(p):
        p = p[:, :, 0, 0]                          # (B, C)
        h = jnp.maximum(p @ w1.T, 0.0)             # (B, C//r)
        return h @ w2.T                            # (B, C)

    out = fc_path(avg) + fc_path(mx)
    return jax.nn.sigmoid(out)[:, :, None, None]


if __name__ == "__main__":
    key = jax.random.PRNGKey(0)
    B, C, Hs, Ws = 2, 32, 16, 16
    ratio = 8
    hidden = C // ratio

    kx, k1, k2, kx2 = jax.random.split(key, 4)
    x = jax.random.normal(kx, (B, C, Hs, Ws), dtype=jnp.float32)
    # Conv2d(C, C//r, 1, bias=False) weight -> (C//r, C); Conv2d(C//r, C, 1) -> (C, C//r)
    w1 = jax.random.normal(k1, (hidden, C), dtype=jnp.float32) * 0.1
    w2 = jax.random.normal(k2, (C, hidden), dtype=jnp.float32) * 0.1

    # Case 1: H*W divisible by the tile -> exercises multi-step streaming.
    y = channel_attention(x, w1, w2, t_hw=128)
    y = jax.block_until_ready(y)
    y_ref = channel_attention_ref(x, w1, w2)
    assert y.shape == (B, C, 1, 1)
    assert jnp.allclose(y, y_ref, atol=1e-5, rtol=1e-5)

    # Case 2: H*W not a multiple of 128 -> exercises the masked last tile.
    x2 = jax.random.normal(kx2, (B, C, 12, 12), dtype=jnp.float32)
    y2 = jax.block_until_ready(channel_attention(x2, w1, w2))
    y2_ref = channel_attention_ref(x2, w1, w2)
    assert jnp.allclose(y2, y2_ref, atol=1e-5, rtol=1e-5)

    print("KERNEL_OK")
</pallas_src>

<mosaic_0001>
module attributes {stable_mosaic.version = 11 : i64} {
  func.func @kernel(%arg0: i32, %arg1: i32, %arg2: memref<1x32x128xf32, #tpu.memory_space<vmem>>, %arg3: memref<32x4xf32, #tpu.memory_space<vmem>>, %arg4: memref<4x32xf32, #tpu.memory_space<vmem>>, %arg5: memref<1x1x32xf32, #tpu.memory_space<vmem>>, %arg6: memref<32x128xf32, #tpu.memory_space<vmem>>, %arg7: memref<32x128xf32, #tpu.memory_space<vmem>>) attributes {dimension_semantics = [#tpu.dimension_semantics<parallel>, #tpu.dimension_semantics<arbitrary>], iteration_bounds = array<i64: 2, 2>, scalar_prefetch = 0 : i64, scratch_operands = 2 : i64, tpu.core_type = #tpu.core_type<tc>, window_params = [{transform_indices = @transform_0, window_bounds = array<i64: 1, 32, 128>}, {pipeline_mode = #tpu.pipeline_mode<synchronous>, transform_indices = @transform_1, window_bounds = array<i64: 32, 4>}, {pipeline_mode = #tpu.pipeline_mode<synchronous>, transform_indices = @transform_2, window_bounds = array<i64: 4, 32>}, {transform_indices = @transform_3, window_bounds = array<i64: 1, 1, 32>}]} {
    %c0_i32 = arith.constant 0 : i32
    %0 = arith.cmpi eq, %arg1, %c0_i32 : i32
    %1 = arith.extui %0 : i1 to i32
    %c0_i32_0 = arith.constant 0 : i32
    %2 = arith.cmpi ne, %1, %c0_i32_0 : i32
    scf.if %2 {
      %cst = arith.constant 0.000000e+00 : f32
      %14 = vector.broadcast %cst : f32 to vector<32x128xf32>
      %c0_12 = arith.constant 0 : index
      %c0_13 = arith.constant 0 : index
      %15 = vector.load %arg6[%c0_12, %c0_13] : memref<32x128xf32, #tpu.memory_space<vmem>>, vector<32x128xf32>
      tpu.vector_store %arg6[%c0_12, %c0_13], %14 {strides = array<i32>} : memref<32x128xf32, #tpu.memory_space<vmem>>, vector<32x128xf32>,
      %cst_14 = arith.constant 0xFF800000 : f32
      %16 = vector.broadcast %cst_14 : f32 to vector<32x128xf32>
      %c0_15 = arith.constant 0 : index
      %c0_16 = arith.constant 0 : index
      %17 = vector.load %arg7[%c0_15, %c0_16] : memref<32x128xf32, #tpu.memory_space<vmem>>, vector<32x128xf32>
      tpu.vector_store %arg7[%c0_15, %c0_16], %16 {strides = array<i32>} : memref<32x128xf32, #tpu.memory_space<vmem>>, vector<32x128xf32>,
    } else {
    }
    %c0 = arith.constant 0 : index
    %c0_1 = arith.constant 0 : index
    %c0_2 = arith.constant 0 : index
    %3 = vector.load %arg2[%c0, %c0_1, %c0_2] : memref<1x32x128xf32, #tpu.memory_space<vmem>>, vector<1x32x128xf32>
    %4 = vector.shape_cast %3 : vector<1x32x128xf32> to vector<32x128xf32>
    %c0_3 = arith.constant 0 : index
    %c0_4 = arith.constant 0 : index
    %5 = vector.load %arg6[%c0_3, %c0_4] : memref<32x128xf32, #tpu.memory_space<vmem>>, vector<32x128xf32>
    %6 = arith.addf %5, %4 : vector<32x128xf32>
    %c0_5 = arith.constant 0 : index
    %c0_6 = arith.constant 0 : index
    %7 = vector.load %arg6[%c0_5, %c0_6] : memref<32x128xf32, #tpu.memory_space<vmem>>, vector<32x128xf32>
    tpu.vector_store %arg6[%c0_5, %c0_6], %6 {strides = array<i32>} : memref<32x128xf32, #tpu.memory_space<vmem>>, vector<32x128xf32>,
    %c0_7 = arith.constant 0 : index
    %c0_8 = arith.constant 0 : index
    %8 = vector.load %arg7[%c0_7, %c0_8] : memref<32x128xf32, #tpu.memory_space<vmem>>, vector<32x128xf32>
    %9 = arith.maximumf %8, %4 : vector<32x128xf32>
    %c0_9 = arith.constant 0 : index
    %c0_10 = arith.constant 0 : index
    %10 = vector.load %arg7[%c0_9, %c0_10] : memref<32x128xf32, #tpu.memory_space<vmem>>, vector<32x128xf32>
    tpu.vector_store %arg7[%c0_9, %c0_10], %9 {strides = array<i32>} : memref<32x128xf32, #tpu.memory_space<vmem>>, vector<32x128xf32>,
    %c1_i32 = arith.constant 1 : i32
    %11 = arith.cmpi eq, %arg1, %c1_i32 : i32
    %12 = arith.extui %11 : i1 to i32
    %c0_i32_11 = arith.constant 0 : i32
    %13 = arith.cmpi ne, %12, %c0_i32_11 : i32
    scf.if %13 {
      %c0_12 = arith.constant 0 : index
      %c0_13 = arith.constant 0 : index
      %14 = vector.load %arg6[%c0_12, %c0_13] : memref<32x128xf32, #tpu.memory_space<vmem>>, vector<32x128xf32>
      %cst = arith.constant dense<0.000000e+00> : vector<32xf32>
      %15 = vector.multi_reduction <add>, %14, %cst [1] : vector<32x128xf32> to vector<32xf32>
      %16 = vector.shape_cast %15 : vector<32xf32> to vector<32x1xf32>
      %cst_14 = arith.constant 3.906250e-03 : f32
      %17 = vector.broadcast %cst_14 : f32 to vector<32x1xf32>
      %18 = arith.mulf %16, %17 : vector<32x1xf32>
      %c0_15 = arith.constant 0 : index
      %c0_16 = arith.constant 0 : index
      %19 = vector.load %arg7[%c0_15, %c0_16] : memref<32x128xf32, #tpu.memory_space<vmem>>, vector<32x128xf32>
      %cst_17 = arith.constant dense<0xFF800000> : vector<32xf32>
      %20 = vector.multi_reduction <maximumf>, %19, %cst_17 [1] : vector<32x128xf32> to vector<32xf32>
      %21 = vector.shape_cast %20 : vector<32xf32> to vector<32x1xf32>
      %c0_18 = arith.constant 0 : index
      %c0_19 = arith.constant 0 : index
      %22 = vector.load %arg3[%c0_18, %c0_19] : memref<32x4xf32, #tpu.memory_space<vmem>>, vector<32x4xf32>
      %c0_20 = arith.constant 0 : index
      %c0_21 = arith.constant 0 : index
      %23 = vector.load %arg4[%c0_20, %c0_21] : memref<4x32xf32, #tpu.memory_space<vmem>>, vector<4x32xf32>
      %24 = vector.broadcast %18 : vector<32x1xf32> to vector<32x4xf32>
      %25 = arith.mulf %22, %24 : vector<32x4xf32>
      %cst_22 = arith.constant dense<0.000000e+00> : vector<4xf32>
      %26 = vector.multi_reduction <add>, %25, %cst_22 [0] : vector<32x4xf32> to vector<4xf32>
      %27 = vector.shape_cast %26 : vector<4xf32> to vector<1x4xf32>
      %cst_23 = arith.constant 0.000000e+00 : f32
      %28 = vector.broadcast %cst_23 : f32 to vector<1x4xf32>
      %29 = arith.maximumf %27, %28 : vector<1x4xf32>
      %30 = vector.broadcast %21 : vector<32x1xf32> to vector<32x4xf32>
      %31 = arith.mulf %22, %30 : vector<32x4xf32>
      %cst_24 = arith.constant dense<0.000000e+00> : vector<4xf32>
      %32 = vector.multi_reduction <add>, %31, %cst_24 [0] : vector<32x4xf32> to vector<4xf32>
      %33 = vector.shape_cast %32 : vector<4xf32> to vector<1x4xf32>
      %cst_25 = arith.constant 0.000000e+00 : f32
      %34 = vector.broadcast %cst_25 : f32 to vector<1x4xf32>
      %35 = arith.maximumf %33, %34 : vector<1x4xf32>
      %36 = arith.addf %29, %35 : vector<1x4xf32>
      %cst_26 = arith.constant dense<0.000000e+00> : vector<1x32xf32>
      %37 = tpu.matmul %36, %23, %cst_26 {dimension_numbers = #tpu.dot_dimension_numbers<[1], [0], [0], [1], [0, 0, 1, 1], [], []>} : vector<1x4xf32>, vector<4x32xf32>, vector<1x32xf32> -> vector<1x32xf32>
      %38 = arith.negf %37 : vector<1x32xf32>
      %39 = math.exp %38 : vector<1x32xf32>
      %cst_27 = arith.constant 1.000000e+00 : f32
      %40 = vector.broadcast %cst_27 : f32 to vector<1x32xf32>
      %41 = arith.addf %40, %39 : vector<1x32xf32>
      %42 = arith.divf %40, %41 : vector<1x32xf32>
      %c0_28 = arith.constant 0 : index
      %c0_29 = arith.constant 0 : index
      %c0_30 = arith.constant 0 : index
      %43 = vector.load %arg5[%c0_28, %c0_29, %c0_30] : memref<1x1x32xf32, #tpu.memory_space<vmem>>, vector<1x1x32xf32>
      %44 = vector.shape_cast %43 : vector<1x1x32xf32> to vector<1x32xf32>
      %45 = vector.shape_cast %42 : vector<1x32xf32> to vector<1x1x32xf32>
      tpu.vector_store %arg5[%c0_28, %c0_29, %c0_30], %45 {strides = array<i32>} : memref<1x1x32xf32, #tpu.memory_space<vmem>>, vector<1x1x32xf32>,
    } else {
    }
    return
  }
  func.func @transform_0(%arg0: i32, %arg1: i32) -> (i32, i32, i32) {
    %c0_i32 = arith.constant 0 : i32
    %c0_i32_0 = arith.constant 0 : i32
    return %arg0, %c0_i32, %arg1 : i32, i32, i32
  }
  func.func @transform_1(%arg0: i32, %arg1: i32) -> (i32, i32) {
    %c0_i32 = arith.constant 0 : i32
    %c0_i32_0 = arith.constant 0 : i32
    %c0_i32_1 = arith.constant 0 : i32
    return %c0_i32, %c0_i32_0 : i32, i32
  }
  func.func @transform_2(%arg0: i32, %arg1: i32) -> (i32, i32) {
    %c0_i32 = arith.constant 0 : i32
    %c0_i32_0 = arith.constant 0 : i32
    %c0_i32_1 = arith.constant 0 : i32
    return %c0_i32, %c0_i32_0 : i32, i32
  }
  func.func @transform_3(%arg0: i32, %arg1: i32) -> (i32, i32, i32) {
    %c0_i32 = arith.constant 0 : i32
    %c0_i32_0 = arith.constant 0 : i32
    %c0_i32_1 = arith.constant 0 : i32
    return %arg0, %c0_i32, %c0_i32_0 : i32, i32, i32
  }
}

</mosaic_0001>

<llo_original>
// kernel: tpu_custom_call.1
$region0: #{tpu_custom_call.1}
  #allocation0 [shape = 'u32[]', space=smem, size = 0x4, offset = 0x4, fixed_abs, tag = 'smem constant byte address 0x4 - core index']
  #allocation1 [shape = 'u32[144,128]{1,0:T(1,128)}', space=vmem, size = 0x12000, scoped, tag = 'internal scratch']
  #allocation2 [shape = 'f32[32,128]{1,0:T(8,128)}', space=vmem, size = 0x4000, scoped, tag = 'scratch operand']
  #allocation3 [shape = 'f32[32,128]{1,0:T(8,128)}', space=vmem, size = 0x4000, scoped, tag = 'scratch operand']
  %s0 = inlined_call_operand.hbm [shape: f32[2,32,256], index: 0, kind: input, shape index: {}]
  %s1 = inlined_call_operand.vmem [shape: f32[32,4], index: 1, kind: input, shape index: {}]
  %s2 = inlined_call_operand.vmem [shape: f32[4,32], index: 2, kind: input, shape index: {}]
  %s3 = inlined_call_operand.hbm [shape: f32[2,1,32], index: 3, kind: output, shape index: {}]
  %s4 = sld [smem:[#allocation0]]
  $region57: #{tpu_custom_call.1} parent=0
    _
  %s6 = ssub.s32 1, %s4
  %s7 = scalar_select 0, %s6, %s4
  $region1: #{tpu_custom_call.1} parent=0
    #allocation4 [shape = 'u8[32768]{0}', space=vmem, size = 0x8000, scoped, tag = 'input window, operand 0']
    #allocation5 [shape = 's32[2]{0}', space=sflag, size = 0x8, scoped, tag = 'scoped memory for tpu_custom_call.1']
    #allocation6 [shape = 's32[2]{0}', space=sflag, size = 0x8, scoped, tag = 'scoped memory for tpu_custom_call.1']
    #allocation7 [shape = 'u8[1024]{0}', space=vmem, size = 0x400, scoped, tag = 'output window, operand 0']
    %8 = vsyncpa [#allocation5], 0
    %s9 = scalar_lea.sflag [#allocation5], 1
    %10 = vsyncpa %s9, 0
    %11 = vsyncpa [#allocation6], 0
    %s12 = scalar_lea.sflag [#allocation6], 1
    %13 = vsyncpa %s12, 0
    loop: start=0, step=1, limit=6
    $region2: #{tpu_custom_call.1} parent=1 // loop_pre_header
      _
    $region3: #{tpu_custom_call.1} parent=1 // loop_header
      %s15 = sphi 0, %s19
      %p16 = scmp.ge.s32.totalorder %s15, 6
      %s22 = sphi 0, %s34
      %s23 = sphi 0, %s30
      %s24 = sphi 0, %s22
      %s25 = sphi 0, %s23
      %s26 = sphi 0, %s24
      %s27 = sphi 0, %s25
      %s39 = sphi 0, %s41
      %s42 = sphi 0, %s39
      %s43 = sphi 0, %s42
      %s59 = sphi 0, %s43
      %s63 = sphi 0, %s63
      %s65 = sphi 0, %s63
      %s66 = sphi 0, %s65
      %s80 = sphi 0, %s66
      %s84 = sphi 0, %s84
      %s86 = sphi 0, %s84
      %s87 = sphi 0, %s86
      %s101 = sphi 0, %s87
      %s107 = sphi 0, %s109
      %s110 = sphi 0, %s107
      %s111 = sphi 0, %s110
      %s127 = sphi 0, %s111
    $region4: #{tpu_custom_call.1} parent=1 // loop_header_branch
      %18 = sbr.rel (%p16) target = $region8
    $region5: #{tpu_custom_call.1} parent=1 // loop_body
      %s20 = ssub.s32 %s15, 1
      %s21 = ssub.s32 %s15, 2
      %s28 = sadd.s32 1, %s23
      %p29 = scmp.ge.s32.totalorder %s28, 2
      %s30 = scalar_select %p29, 0, %s28
      %s31 = sadd.s32 1, %s22
      %s32 = scalar_select %p29, %s31, %s22
      %p33 = scmp.ge.s32.totalorder %s32, 2
      %s34 = scalar_select %p33, 0, %s32
      %s35 = ssub.s32 %s22, %s34
      %s36 = ssub.s32 %s23, %s30
      %s37 = sor.u32 %s35, %s36
      %p38 = scmp.eq.s32.totalorder %s37, 0
      %s40 = sadd.s32 %s39, 1
      %s41 = scalar_select %p38, %s39, %s40
      %p44 = pneg %p38
      %p45 = scmp.eq.s32.totalorder %s15, 3
      %p46 = por %p44, %p45
      %p47 = scmp.ne.s32.totalorder %s39, %s42
      %p48 = scmp.eq.s32.totalorder %s15, 0
      %p49 = por %p47, %p48
      %p50 = scmp.ne.s32.totalorder %s39, %s42
      %p51 = scmp.eq.s32.totalorder %s20, 3
      %p52 = por %p50, %p51
      %p53 = scmp.ne.s32.totalorder %s42, %s43
      %p54 = scmp.eq.s32.totalorder %s20, 0
      %p55 = por %p53, %p54
      %p56 = scmp.ne.s32.totalorder %s42, %s43
      %p57 = scmp.eq.s32.totalorder %s21, 3
      %p58 = por %p56, %p57
      %p60 = scmp.ne.s32.totalorder %s43, %s59
      %p61 = scmp.eq.s32.totalorder %s21, 0
      %p62 = por %p60, %p61
      %s64 = sadd.s32 %s63, 1
      %p67 = scmp.eq.s32.totalorder %s15, 3
      %p68 = scmp.ne.s32.totalorder %s63, %s65
      %p69 = scmp.eq.s32.totalorder %s15, 0
      %p70 = por %p68, %p69
      %p71 = scmp.ne.s32.totalorder %s63, %s65
      %p72 = scmp.eq.s32.totalorder %s20, 3
      %p73 = por %p71, %p72
      %p74 = scmp.ne.s32.totalorder %s65, %s66
      %p75 = scmp.eq.s32.totalorder %s20, 0
      %p76 = por %p74, %p75
      %p77 = scmp.ne.s32.totalorder %s65, %s66
      %p78 = scmp.eq.s32.totalorder %s21, 3
      %p79 = por %p77, %p78
      %p81 = scmp.ne.s32.totalorder %s66, %s80
      %p82 = scmp.eq.s32.totalorder %s21, 0
      %p83 = por %p81, %p82
      %s85 = sadd.s32 %s84, 1
      %p88 = scmp.eq.s32.totalorder %s15, 3
      %p89 = scmp.ne.s32.totalorder %s84, %s86
      %p90 = scmp.eq.s32.totalorder %s15, 0
      %p91 = por %p89, %p90
      %p92 = scmp.ne.s32.totalorder %s84, %s86
      %p93 = scmp.eq.s32.totalorder %s20, 3
      %p94 = por %p92, %p93
      %p95 = scmp.ne.s32.totalorder %s86, %s87
      %p96 = scmp.eq.s32.totalorder %s20, 0
      %p97 = por %p95, %p96
      %p98 = scmp.ne.s32.totalorder %s86, %s87
      %p99 = scmp.eq.s32.totalorder %s21, 3
      %p100 = por %p98, %p99
      %p102 = scmp.ne.s32.totalorder %s87, %s101
      %p103 = scmp.eq.s32.totalorder %s21, 0
      %p104 = por %p102, %p103
      %s105 = ssub.s32 %s22, %s34
      %p106 = scmp.eq.s32.totalorder %s105, 0
      %s108 = sadd.s32 %s107, 1
      %s109 = scalar_select %p106, %s107, %s108
      %p112 = pneg %p106
      %p113 = scmp.eq.s32.totalorder %s15, 3
      %p114 = por %p112, %p113
      %p115 = scmp.ne.s32.totalorder %s107, %s110
      %p116 = scmp.eq.s32.totalorder %s15, 0
      %p117 = por %p115, %p116
      %p118 = scmp.ne.s32.totalorder %s107, %s110
      %p119 = scmp.eq.s32.totalorder %s20, 3
      %p120 = por %p118, %p119
      %p121 = scmp.ne.s32.totalorder %s110, %s111
      %p122 = scmp.eq.s32.totalorder %s20, 0
      %p123 = por %p121, %p122
      %p124 = scmp.ne.s32.totalorder %s110, %s111
      %p125 = scmp.eq.s32.totalorder %s21, 3
      %p126 = por %p124, %p125
      %p128 = scmp.ne.s32.totalorder %s111, %s127
      %p129 = scmp.eq.s32.totalorder %s21, 0
      %p130 = por %p128, %p129
      %p131 = scmp.le.s32.totalorder 1, %s15
      %p132 = scmp.lt.s32.totalorder %s15, 5
      %p133 = pnand %p131, %p132
      %p134 = pneg %p133
      // Predicated region
      $region9: #{tpu_custom_call.1} parent=5 // pred_check
        _
      $region10: #{tpu_custom_call.1} parent=5 // pred_check_branch
        %136 = sbr.rel (%p133) target = $region12
      $region11: #{tpu_custom_call.1} parent=5 // pred_region
        %s137 = ssub.s32 %s15, 1
        // Predicated region
        $region13: #{tpu_custom_call.1} parent=11 // pred_check
          %p138 = pneg %p76
        $region14: #{tpu_custom_call.1} parent=11 // pred_check_branch
          %140 = sbr.rel (%p138) target = $region16
        $region15: #{tpu_custom_call.1} parent=11 // pred_region
          _
        $region16: #{tpu_custom_call.1} parent=11 // pred_fallthru
          _
        // Predicated region
        $region17: #{tpu_custom_call.1} parent=11 // pred_check
          %p141 = pneg %p97
        $region18: #{tpu_custom_call.1} parent=11 // pred_check_branch
          %143 = sbr.rel (%p141) target = $region20
        $region19: #{tpu_custom_call.1} parent=11 // pred_region
          _
        $region20: #{tpu_custom_call.1} parent=11 // pred_fallthru
          _
      $region12: #{tpu_custom_call.1} parent=5 // pred_fallthru
        _
      %p144 = scmp.lt.s32.totalorder %s15, 4
      // Predicated region
      $region21: #{tpu_custom_call.1} parent=5 // pred_check
        %p145 = pneg %p144
      $region22: #{tpu_custom_call.1} parent=5 // pred_check_branch
        %147 = sbr.rel (%p145) target = $region24
      $region23: #{tpu_custom_call.1} parent=5 // pred_region
        // Predicated region
        $region25: #{tpu_custom_call.1} parent=23 // pred_check
          %p148 = pneg %p49
        $region26: #{tpu_custom_call.1} parent=23 // pred_check_branch
          %150 = sbr.rel (%p148) target = $region28
        $region27: #{tpu_custom_call.1} parent=23 // pred_region
          %s151 = sand.u32 %s39, 1
          %s152 = scalar_lea.sflag [#allocation5], %s151
          %s153 = sand.u32 %s39, 1
          %s154 = smul.addr %s153, 32
          %s155 = scalar_lea.vmem [#allocation4], %s154
          %s157 = ssub.s32 512, 512
          %158 = vsyncadd %s152, %s157
          %s159 = smul.addr %s22, 8
          %s160 = sadd.s32 %s23, %s159
          %s161 = smul.addr %s160, 128
          %s162 = scalar_lea.hbm %s0, %s161
          %s163 = sshll.u32 %s155, 4
          %s164 = int_to_ptr.vmem [resolvable:$true] %s163
          %169 = dma.hbm_to_vmem [thread:$0]  %s162, 512, %s164, %s152, 256, 128, 8
        $region28: #{tpu_custom_call.1} parent=23 // pred_fallthru
          _
      $region24: #{tpu_custom_call.1} parent=5 // pred_fallthru
        _
      %p170 = scmp.le.s32.totalorder 1, %s15
      %p171 = scmp.lt.s32.totalorder %s15, 5
      %p172 = pnand %p170, %p171
      %p173 = pneg %p172
      // Predicated region
      $region29: #{tpu_custom_call.1} parent=5 // pred_check
        _
      $region30: #{tpu_custom_call.1} parent=5 // pred_check_branch
        %175 = sbr.rel (%p172) target = $region32
      $region31: #{tpu_custom_call.1} parent=5 // pred_region
        %s176 = ssub.s32 %s15, 1
        %s177 = sand.u32 %s42, 1
        %s178 = scalar_lea.sflag [#allocation5], %s177
        %s179 = sand.u32 %s42, 1
        %s180 = smul.addr %s179, 32
        %s181 = scalar_lea.vmem [#allocation4], %s180
        // Predicated region
        $region33: #{tpu_custom_call.1} parent=31 // pred_check
          %p182 = pneg %p55
        $region34: #{tpu_custom_call.1} parent=31 // pred_check_branch
          %184 = sbr.rel (%p182) target = $region36
        $region35: #{tpu_custom_call.1} parent=31 // pred_region
          %185 = dma.done %s178, 512
        $region36: #{tpu_custom_call.1} parent=31 // pred_fallthru
          _
        %s186 = sand.u32 %s42, 1
        %s187 = scalar_lea.sflag [#allocation5], %s186
        %s188 = sand.u32 %s42, 1
        %s189 = smul.addr %s188, 32
        %s190 = scalar_lea.vmem [#allocation4], %s189
        %p191 = pneg %p55
        %p192 = pneg %p52
        %p193 = pneg %p76
        %p194 = pneg %p73
        %p195 = pneg %p97
        %p196 = pneg %p94
        %p197 = pneg %p123
        %p198 = pneg %p120
        %s199 = sand.u32 %s110, 1
        %s200 = scalar_lea.sflag [#allocation6], %s199
        %s201 = sand.u32 %s110, 1
        %s202 = scalar_lea.vmem [#allocation7], %s201
        %p203 = scmp.eq.s32.totalorder %s25, 0
        // Predicated region
        $region37: #{tpu_custom_call.1} parent=31 // pred_check
          %p204 = pneg %p203
        $region38: #{tpu_custom_call.1} parent=31 // pred_check_branch
          %206 = sbr.rel (%p204) target = $region40
        $region39: #{tpu_custom_call.1} parent=31 // pred_region
          %207 = vst [vmem:[#allocation2] sm:$0xff] 0.0
          %208 = vst [vmem:[#allocation2 + $0x8] sm:$0xff] 0.0
          %209 = vst [vmem:[#allocation2 + $0x10] sm:$0xff] 0.0
          %210 = vst [vmem:[#allocation2 + $0x18] sm:$0xff] 0.0
          %211 = vst [vmem:[#allocation3] sm:$0xff] -inf
          %212 = vst [vmem:[#allocation3 + $0x8] sm:$0xff] -inf
          %213 = vst [vmem:[#allocation3 + $0x10] sm:$0xff] -inf
          %214 = vst [vmem:[#allocation3 + $0x18] sm:$0xff] -inf
        $region40: #{tpu_custom_call.1} parent=31 // pred_fallthru
          _
        %v215 = vld [vmem:[%s181] sm:$0xff]
        %v216 = vld [vmem:[%s181 + $0x8] sm:$0xff]
        %v217 = vld [vmem:[%s181 + $0x10] sm:$0xff]
        %v218 = vld [vmem:[%s181 + $0x18] sm:$0xff]
        %v219 = vld [vmem:[#allocation2] sm:$0xff]
        %v220 = vld [vmem:[#allocation2 + $0x8] sm:$0xff]
        %v221 = vld [vmem:[#allocation2 + $0x10] sm:$0xff]
        %v222 = vld [vmem:[#allocation2 + $0x18] sm:$0xff]
        %v223 = vadd.f32 %v219, %v215
        %v224 = vadd.f32 %v220, %v216
        %v225 = vadd.f32 %v221, %v217
        %v226 = vadd.f32 %v222, %v218
        %227 = vst [vmem:[#allocation2] sm:$0xff] %v223
        %228 = vst [vmem:[#allocation2 + $0x8] sm:$0xff] %v224
        %229 = vst [vmem:[#allocation2 + $0x10] sm:$0xff] %v225
        %230 = vst [vmem:[#allocation2 + $0x18] sm:$0xff] %v226
        %v231 = vld [vmem:[#allocation3] sm:$0xff]
        %v232 = vld [vmem:[#allocation3 + $0x8] sm:$0xff]
        %v233 = vld [vmem:[#allocation3 + $0x10] sm:$0xff]
        %v234 = vld [vmem:[#allocation3 + $0x18] sm:$0xff]
        %v235 = vmax.f32 %v231, %v215
        %v236 = vmax.f32 %v232, %v216
        %v237 = vmax.f32 %v233, %v217
        %v238 = vmax.f32 %v234, %v218
        %239 = vst [vmem:[#allocation3] sm:$0xff] %v235
        %240 = vst [vmem:[#allocation3 + $0x8] sm:$0xff] %v236
        %241 = vst [vmem:[#allocation3 + $0x10] sm:$0xff] %v237
        %242 = vst [vmem:[#allocation3 + $0x18] sm:$0xff] %v238
        %p243 = scmp.eq.s32.totalorder %s25, 1
        // Predicated region
        $region41: #{tpu_custom_call.1} parent=31 // pred_check
          %p244 = pneg %p243
        $region42: #{tpu_custom_call.1} parent=31 // pred_check_branch
          %246 = sbr.rel (%p244) target = $region44
        $region43: #{tpu_custom_call.1} parent=31 // pred_region
          %v247 = vld [vmem:[#allocation2] sm:$0xff]
          %v248 = vld [vmem:[#allocation2 + $0x8] sm:$0xff]
          %v249 = vld [vmem:[#allocation2 + $0x10] sm:$0xff]
          %v250 = vld [vmem:[#allocation2 + $0x18] sm:$0xff]
          %251 = vadd.xlane.f32.xlu0 %v247
          %v252 = vpop.xlane.xlu0 %251
          %253 = vadd.xlane.f32.xlu0 %v248
          %v254 = vpop.xlane.xlu0 %253
          %255 = vadd.xlane.f32.xlu0 %v249
          %v256 = vpop.xlane.xlu0 %255
          %257 = vadd.xlane.f32.xlu0 %v250
          %v258 = vpop.xlane.xlu0 %257
          %v259 = vmul.f32 %v252, 0.00390625
          %v260 = vmul.f32 %v254, 0.00390625
          %v261 = vmul.f32 %v256, 0.00390625
          %v262 = vmul.f32 %v258, 0.00390625
          %v263 = vld [vmem:[#allocation3] sm:$0xff]
          %v264 = vld [vmem:[#allocation3 + $0x8] sm:$0xff]
          %v265 = vld [vmem:[#allocation3 + $0x10] sm:$0xff]
          %v266 = vld [vmem:[#allocation3 + $0x18] sm:$0xff]
          %267 = vmax.xlane.f32.xlu0 %v263
          %v268 = vpop.xlane.xlu0 %267
          %269 = vmax.xlane.f32.xlu0 %v264
          %v270 = vpop.xlane.xlu0 %269
          %271 = vmax.xlane.f32.xlu0 %v265
          %v272 = vpop.xlane.xlu0 %271
          %273 = vmax.xlane.f32.xlu0 %v266
          %v274 = vpop.xlane.xlu0 %273
          %v275 = vld [vmem:[%s1] sm:$0xff]
          %v276 = vld [vmem:[%s1 + $0x8] sm:$0xff]
          %v277 = vld [vmem:[%s1 + $0x10] sm:$0xff]
          %v278 = vld [vmem:[%s1 + $0x18] sm:$0xff]
          %v279 = vld [vmem:[%s2] sm:$0xf]
          %v280 = vmul.f32 %v275, %v259
          %v281 = vmul.f32 %v276, %v260
          %v282 = vmul.f32 %v277, %v261
          %v283 = vmul.f32 %v278, %v262
          %vm284 = vcmask 31744
          %v285 = vsel %vm284, %v280, 0.0
          %v286 = vsel %vm284, %v281, 0.0
          %v287 = vadd.f32 %v285, %v286
          %v288 = vsel %vm284, %v282, 0.0
          %v289 = vadd.f32 %v287, %v288
          %v290 = vsel %vm284, %v283, 0.0
          %v291 = vadd.f32 %v289, %v290
          %v292 = vrot.slane %v291, 4
          %v293 = vadd.f32 %v291, %v292
          %v294 = vrot.slane %v293, 2
          %v295 = vadd.f32 %v293, %v294
          %v296 = vrot.slane %v295, 1
          %v297 = vadd.f32 %v295, %v296
          %v298 = vmax.f32 %v297, 0.0
          %v299 = vmul.f32 %v275, %v268
          %v300 = vmul.f32 %v276, %v270
          %v301 = vmul.f32 %v277, %v272
          %v302 = vmul.f32 %v278, %v274
          %v303 = vsel %vm284, %v299, 0.0
          %v304 = vsel %vm284, %v300, 0.0
          %v305 = vadd.f32 %v303, %v304
          %v306 = vsel %vm284, %v301, 0.0
          %v307 = vadd.f32 %v305, %v306
          %v308 = vsel %vm284, %v302, 0.0
          %v309 = vadd.f32 %v307, %v308
          %v310 = vrot.slane %v309, 4
          %v311 = vadd.f32 %v309, %v310
          %v312 = vrot.slane %v311, 2
          %v313 = vadd.f32 %v311, %v312
          %v314 = vrot.slane %v313, 1
          %v315 = vadd.f32 %v313, %v314
          %v316 = vmax.f32 %v315, 0.0
          %v317 = vadd.f32 %v298, %v316
          %v319 = vsel %vm284, %v317, 0
          %vm321 = vcmask 1043456
          %v323 = vsel %vm321, %v279, 0
          %325 = vmatprep.subr.mxu0 0.0
          %326 = vmatpush1.msra.mxu0 0.0
          %327 = vmatprep.subr.mxu0 0.0
          %328 = vmatpush1.msra.mxu0 0.0
          %329 = vmatprep.subr.mxu0 0.0
          %330 = vmatpush1.msra.mxu0 0.0
          %331 = vmatprep.subr.mxu0 0.0
          %332 = vmatpush1.msra.mxu0 0.0
          %333 = vmatprep.subr.mxu0 0.0
          %334 = vmatpush1.msra.mxu0 0.0
          %335 = vmatprep.subr.mxu0 0.0
          %336 = vmatpush1.msra.mxu0 0.0
          %337 = vmatprep.subr.mxu0 0.0
          %338 = vmatpush1.msra.mxu0 0.0
          %339 = vmatprep.subr.mxu0 0.0
          %340 = vmatpush1.msra.mxu0 0.0
          %341 = vmatprep.subr.mxu0 0.0
          %342 = vmatpush1.msra.mxu0 0.0
          %343 = vmatprep.subr.mxu0 0.0
          %344 = vmatpush1.msra.mxu0 0.0
          %345 = vmatprep.subr.mxu0 0.0
          %346 = vmatpush1.msra.mxu0 0.0
          %347 = vmatprep.subr.mxu0 0.0
          %348 = vmatpush1.msra.mxu0 0.0
          %349 = vmatprep.subr.mxu0 0.0
          %350 = vmatpush1.msra.mxu0 0.0
          %351 = vmatprep.subr.mxu0 0.0
          %352 = vmatpush1.msra.mxu0 0.0
          %353 = vmatprep.subr.mxu0 0.0
          %354 = vmatpush1.msra.mxu0 0.0
          %355 = vmatprep.subr.mxu0 0.0
          %356 = vmatpush1.msra.mxu0 %v323
          %357 = vmatprep.subr.mxu0 0.0
          %358 = vmatpush2.msra.mxu0 0.0
          %359 = vmatprep.subr.mxu0 0.0
          %360 = vmatpush2.msra.mxu0 0.0
          %361 = vmatprep.subr.mxu0 0.0
          %362 = vmatpush2.msra.mxu0 0.0
          %363 = vmatprep.subr.mxu0 0.0
          %364 = vmatpush2.msra.mxu0 0.0
          %365 = vmatprep.subr.mxu0 0.0
          %366 = vmatpush2.msra.mxu0 0.0
          %367 = vmatprep.subr.mxu0 0.0
          %368 = vmatpush2.msra.mxu0 0.0
          %369 = vmatprep.subr.mxu0 0.0
          %370 = vmatpush2.msra.mxu0 0.0
          %371 = vmatprep.subr.mxu0 0.0
          %372 = vmatpush2.msra.mxu0 0.0
          %373 = vmatprep.subr.mxu0 0.0
          %374 = vmatpush2.msra.mxu0 0.0
          %375 = vmatprep.subr.mxu0 0.0
          %376 = vmatpush2.msra.mxu0 0.0
          %377 = vmatprep.subr.mxu0 0.0
          %378 = vmatpush2.msra.mxu0 0.0
          %379 = vmatprep.subr.mxu0 0.0
          %380 = vmatpush2.msra.mxu0 0.0
          %381 = vmatprep.subr.mxu0 0.0
          %382 = vmatpush2.msra.mxu0 0.0
          %383 = vmatprep.subr.mxu0 0.0
          %384 = vmatpush2.msra.mxu0 0.0
          %385 = vmatprep.subr.mxu0 0.0
          %386 = vmatpush2.msra.mxu0 0.0
          %387 = vmatprep.subr.mxu0 0.0
          %388 = vmatpush2.msra.mxu0 0.0
          %389 = vmatprep.mubr.f32.mxu0 0.0
          %390 = vmatmul.mubr.f32.gmra.mxu0 %v319
          %v391 = vpop.f32.mrf.mxu0
          %v392 = vadd.f32 0.0, %v391
          %v393 = vpop.f32.mrf.mxu0
          %394 = vdwg.mxu0
          %v395 = vxor.u32 %v392, 2147483648
          %v396 = vmul.f32 %v395, 1.442695
          %v397 = vpow.pop %v396
          %v398 = vadd.f32 %v397, 1.0
          %v399 = vrcp.pop %v398
          %v400 = vmul.f32 1.0, %v399
          %vm401 = vcmask 253952
          %402 = vst.msk [vmem:[%s202] sm:$0x1] %vm401, %v400
        $region44: #{tpu_custom_call.1} parent=31 // pred_fallthru
          _
        %s403 = sand.u32 %s110, 1
        %s404 = scalar_lea.sflag [#allocation6], %s403
        %s405 = sand.u32 %s110, 1
        %s406 = scalar_lea.vmem [#allocation7], %s405
        // Predicated region
        $region45: #{tpu_custom_call.1} parent=31 // pred_check
          %p407 = pneg %p120
        $region46: #{tpu_custom_call.1} parent=31 // pred_check_branch
          %409 = sbr.rel (%p407) target = $region48
        $region47: #{tpu_custom_call.1} parent=31 // pred_region
          %s411 = ssub.s32 16, 16
          %412 = vsyncadd %s404, %s411
          %s413 = smul.addr %s24, 16
          %s414 = scalar_lea.hbm %s3, %s413
          %s416 = sshll.u32 %s406, 4
          %s417 = int_to_ptr.vmem [resolvable:$true] %s416
          %419 = dma.vmem_to_hbm [thread:$0]  %s417, 16, %s414, %s404
        $region48: #{tpu_custom_call.1} parent=31 // pred_fallthru
          _
      $region32: #{tpu_custom_call.1} parent=5 // pred_fallthru
        _
      %p420 = scmp.le.s32.totalorder 2, %s15
      // Predicated region
      $region49: #{tpu_custom_call.1} parent=5 // pred_check
        %p421 = pneg %p420
      $region50: #{tpu_custom_call.1} parent=5 // pred_check_branch
        %423 = sbr.rel (%p421) target = $region52
      $region51: #{tpu_custom_call.1} parent=5 // pred_region
        %s424 = ssub.s32 %s15, 2
        // Predicated region
        $region53: #{tpu_custom_call.1} parent=51 // pred_check
          %p425 = pneg %p126
        $region54: #{tpu_custom_call.1} parent=51 // pred_check_branch
          %427 = sbr.rel (%p425) target = $region56
        $region55: #{tpu_custom_call.1} parent=51 // pred_region
          %s428 = sand.u32 %s111, 1
          %s429 = scalar_lea.sflag [#allocation6], %s428
          %s430 = sand.u32 %s111, 1
          %s431 = scalar_lea.vmem [#allocation7], %s430
          %432 = dma.done %s429, 16
        $region56: #{tpu_custom_call.1} parent=51 // pred_fallthru
          _
      $region52: #{tpu_custom_call.1} parent=5 // pred_fallthru
        _
    $region6: #{tpu_custom_call.1} parent=1 // loop_footer
      %s19 = sadd.s32 1, %s15
    $region7: #{tpu_custom_call.1} parent=1 // loop_footer_branch
      %14 = sbr.rel target = $region3
    $region8: #{tpu_custom_call.1} parent=1 // loop_exit
      _
    %433 = vsyncpa [#allocation5], 1
    %s434 = scalar_lea.sflag [#allocation5], 1
    %435 = vsyncpa %s434, 1
    %436 = vsyncpa [#allocation6], 1
    %s437 = scalar_lea.sflag [#allocation6], 1
    %438 = vsyncpa %s437, 1

</llo_original>
